<compile_context>
chip_gen: v6e
topology: v6e:2x2x1
jax: 0.10.0
libtpu: 0.0.40
codegen_flags: <defaults>
</compile_context>

<pallas_src>
import numpy as np
import jax
import jax.numpy as jnp
from jax import lax
from jax.experimental import pallas as pl
from jax.experimental.pallas import tpu as pltpu


def _make_kernel(K, L, p, F0, F2, W):
    """Kernel body for one grid step.

    The activation block is (Cin, W) with W = TB*L: TB batch windows of
    length L packed along the lane axis.  Each Conv1d is a single MXU matmul
    against an unfold that stacks the K taps along the contraction axis; the
    "same" padding is realized with shifted lane slices that are masked so a
    window never reads into its neighbour.
    """

    def unfold(a, jmod):
        # a: (C, W) -> (K*C, W); row index = k*C + c (matches weight layout).
        C = a.shape[0]
        taps = []
        for k in range(K):
            d = k - p                                # tap offset in [-p, p]
            if d == 0:
                s = a
            elif d > 0:
                # s[:, j] = a[:, j + d]; zero where j + d crosses the window.
                s = jnp.concatenate(
                    [a[:, d:], jnp.zeros((C, d), a.dtype)], axis=1)
                s = jnp.where(jmod < L - d, s, 0.0)
            else:
                dd = -d
                # s[:, j] = a[:, j - dd]; zero where j - dd crosses the window.
                s = jnp.concatenate(
                    [jnp.zeros((C, dd), a.dtype), a[:, :W - dd]], axis=1)
                s = jnp.where(jmod >= dd, s, 0.0)
            taps.append(s)
        return jnp.concatenate(taps, axis=0)         # (K*C, W)

    def conv_relu(a, jmod, w_ref, b_ref):
        xu = unfold(a, jmod)                         # (K*C, W)
        acc = jnp.dot(w_ref[...], xu, preferred_element_type=jnp.float32)
        return jnp.maximum(acc + b_ref[...], 0.0)    # (Cout, W) f32

    def kernel(x_ref, w14_ref, b14_ref, w2_ref, b2_ref, w3_ref, b3_ref,
               out_ref):
        # Lane index within each window; hoisted and reused by every unfold.
        jmod = lax.broadcasted_iota(jnp.int32, (1, W), 1) % L

        x = x_ref[...]                                # (Cin, W) f32

        # conv1 + conv4 fused: both consume the same unfold of x.
        y14 = conv_relu(x, jmod, w14_ref, b14_ref)    # (F0+F2, W)
        out1 = y14[:F0]                               # main path
        identity = y14[F0:F0 + F2]                    # shortcut path

        out2 = conv_relu(out1, jmod, w2_ref, b2_ref)  # (F1, W)
        out3 = conv_relu(out2, jmod, w3_ref, b3_ref)  # (F2, W)

        out_ref[...] = jnp.maximum(out3 + identity, 0.0).astype(out_ref.dtype)

    return kernel


def _pick_tb(B, L):
    """Largest divisor TB of B whose packed width TB*L is a multiple of 128
    (lane-dense blocks), kept at a modest VMEM footprint; fall back to
    TB = B (block == full array, which the (8,128) rule also accepts)."""
    cands = [tb for tb in range(1, B + 1)
             if B % tb == 0 and (tb * L) % 128 == 0]
    if not cands:
        return B
    good = [tb for tb in cands if tb * L <= 16384]    # keep blocks <= ~64K lanes
    return max(good) if good else min(cands)


def convolution_block_pallas(x_ncl, params, kernel_size):
    """x_ncl: (B, Cin, L) float32.  params: dict of (w, b) in PyTorch layout
    (w: (Cout, Cin, K), b: (Cout,)).  Returns (B, F2, L) float32."""
    B, Cin, L = x_ncl.shape
    K = kernel_size
    assert K % 2 == 1, (
        "even kernel_size changes the output length (PyTorch trim branch); "
        "only odd K ('same' conv) is supported")
    p = K // 2

    (w1, b1), (w2, b2), (w3, b3), (w4, b4) = (
        params["conv1"], params["conv2"], params["conv3"], params["conv4"])
    F0, F1, F2 = w1.shape[0], w2.shape[0], w3.shape[0]

    def to_mat(w):
        # (Cout, Cin, K) -> (Cout, K*Cin), column index = k*Cin + cin
        # (matches the in-kernel unfold, which stacks the K taps row-wise).
        cout, cin, k = w.shape
        return jnp.transpose(w, (0, 2, 1)).reshape(cout, k * cin).astype(jnp.float32)

    def to_col(b):  # (Cout,) -> (Cout, 1) f32, broadcasts along the lane axis
        return b.astype(jnp.float32).reshape(-1, 1)

    # Fuse conv1 + conv4: they share the same input unfold.
    w14 = jnp.concatenate([to_mat(w1), to_mat(w4)], axis=0)   # (F0+F2, K*Cin)
    b14 = jnp.concatenate(
        [b1.astype(jnp.float32), b4.astype(jnp.float32)]).reshape(-1, 1)

    # Pack the batch windows along the lane axis: (B, Cin, L) -> (Cin, B*L).
    x_packed = jnp.transpose(x_ncl.astype(jnp.float32), (1, 0, 2)).reshape(
        Cin, B * L)

    TB = _pick_tb(B, L)
    W = TB * L
    grid = (B // TB,)

    const = lambda shape: pl.BlockSpec(shape, lambda i: (0, 0))

    flops = 2 * B * L * K * (Cin * (F0 + F2) + F0 * F1 + F1 * F2)
    bytes_accessed = 4 * (B * L * (Cin + F2)
                          + (F0 + F2) * (K * Cin + 1)
                          + F1 * (K * F0 + 1)
                          + F2 * (K * F1 + 1))

    out_packed = pl.pallas_call(
        _make_kernel(K, L, p, F0, F2, W),
        out_shape=jax.ShapeDtypeStruct((F2, B * L), jnp.float32),
        grid=grid,                                    # pipelined over batch tiles
        in_specs=[
            pl.BlockSpec((Cin, W), lambda i: (0, i)),          # activations
            const((F0 + F2, K * Cin)), const((F0 + F2, 1)),    # conv1+conv4 fused
            const((F1, K * F0)), const((F1, 1)),               # conv2
            const((F2, K * F1)), const((F2, 1)),               # conv3
        ],
        out_specs=pl.BlockSpec((F2, W), lambda i: (0, i)),
        compiler_params=pltpu.CompilerParams(
            dimension_semantics=("parallel",),        # megacore sharding on v7x
            vmem_limit_bytes=48 * 1024 * 1024,        # fits v7x's 64 MiB/core
        ),
        cost_estimate=pl.CostEstimate(
            flops=flops, transcendentals=0, bytes_accessed=bytes_accessed),
    )(x_packed, w14, b14, to_mat(w2), to_col(b2), to_mat(w3), to_col(b3))

    # Cheap layout plumbing back to PyTorch's (B, F2, L).
    return jnp.transpose(out_packed.reshape(F2, B, L), (1, 0, 2))


# ---------------------------------------------------------------------------
# Pure-JAX reference (mirrors the PyTorch forward) for correctness checking.
# ---------------------------------------------------------------------------
def _ref_conv1d(x, w, b, p):
    y = lax.conv_general_dilated(x, w, window_strides=(1,), padding=[(p, p)],
                                 dimension_numbers=("NCH", "OIH", "NCH"))
    return y + b[None, :, None]


def convolution_block_ref(x, params, kernel_size):
    p = kernel_size // 2
    (w1, b1), (w2, b2), (w3, b3), (w4, b4) = (
        params["conv1"], params["conv2"], params["conv3"], params["conv4"])
    out = jax.nn.relu(_ref_conv1d(x, w1, b1, p))
    out = jax.nn.relu(_ref_conv1d(out, w2, b2, p))
    out = jax.nn.relu(_ref_conv1d(out, w3, b3, p))
    identity = jax.nn.relu(_ref_conv1d(x, w4, b4, p))
    return jax.nn.relu(out + identity)


if __name__ == "__main__":
    # ConvolutionBlock(filters=[8, 8, 8], kernel_size=3, input_channels=4)
    B, Cin, L = 2, 4, 16
    filters = (8, 8, 8)
    kernel_size = 3

    key = jax.random.PRNGKey(0)
    keys = jax.random.split(key, 9)

    def init_conv(kw, kb, cout, cin, k):
        w = 0.1 * jax.random.normal(kw, (cout, cin, k), jnp.float32)
        b = 0.1 * jax.random.normal(kb, (cout,), jnp.float32)
        return w, b

    params = {
        "conv1": init_conv(keys[0], keys[1], filters[0], Cin, kernel_size),
        "conv2": init_conv(keys[2], keys[3], filters[1], filters[0], kernel_size),
        "conv3": init_conv(keys[4], keys[5], filters[2], filters[1], kernel_size),
        "conv4": init_conv(keys[6], keys[7], filters[2], Cin, kernel_size),
    }

    x = jax.random.normal(keys[8], (B, Cin, L), jnp.float32)

    y_ref = jax.block_until_ready(convolution_block_ref(x, params, kernel_size))

    y = jax.block_until_ready(convolution_block_pallas(x, params, kernel_size))
    assert y.shape == (B, filters[2], L)
    np.testing.assert_allclose(np.asarray(y), np.asarray(y_ref),
                               rtol=1e-5, atol=1e-5)

    print("KERNEL_OK")
</pallas_src>

<mosaic_0001>
module attributes {stable_mosaic.version = 11 : i64} {
  func.func @kernel(%arg0: i32, %arg1: memref<4x32xf32, #tpu.memory_space<vmem>>, %arg2: memref<16x12xf32, #tpu.memory_space<vmem>>, %arg3: memref<16x1xf32, #tpu.memory_space<vmem>>, %arg4: memref<8x24xf32, #tpu.memory_space<vmem>>, %arg5: memref<8x1xf32, #tpu.memory_space<vmem>>, %arg6: memref<8x24xf32, #tpu.memory_space<vmem>>, %arg7: memref<8x1xf32, #tpu.memory_space<vmem>>, %arg8: memref<8x32xf32, #tpu.memory_space<vmem>>) attributes {dimension_semantics = [#tpu.dimension_semantics<parallel>], iteration_bounds = array<i64: 1>, scalar_prefetch = 0 : i64, scratch_operands = 0 : i64, tpu.core_type = #tpu.core_type<tc>, window_params = [{transform_indices = @transform_0, window_bounds = array<i64: 4, 32>}, {pipeline_mode = #tpu.pipeline_mode<synchronous>, transform_indices = @transform_1, window_bounds = array<i64: 16, 12>}, {pipeline_mode = #tpu.pipeline_mode<synchronous>, transform_indices = @transform_2, window_bounds = array<i64: 16, 1>}, {pipeline_mode = #tpu.pipeline_mode<synchronous>, transform_indices = @transform_3, window_bounds = array<i64: 8, 24>}, {pipeline_mode = #tpu.pipeline_mode<synchronous>, transform_indices = @transform_4, window_bounds = array<i64: 8, 1>}, {pipeline_mode = #tpu.pipeline_mode<synchronous>, transform_indices = @transform_5, window_bounds = array<i64: 8, 24>}, {pipeline_mode = #tpu.pipeline_mode<synchronous>, transform_indices = @transform_6, window_bounds = array<i64: 8, 1>}, {transform_indices = @transform_7, window_bounds = array<i64: 8, 32>}]} {
    %0 = tpu.iota {dimensions = array<i32: 1>} : vector<1x32xi32>
    %c16_i32 = arith.constant 16 : i32
    %c0_i32 = arith.constant 0 : i32
    %1 = arith.cmpi eq, %c16_i32, %c0_i32 : i32
    %c1_i32 = arith.constant 1 : i32
    %2 = arith.select %1, %c1_i32, %c16_i32 : i32
    %3 = vector.broadcast %2 : i32 to vector<1x32xi32>
    %4 = arith.remsi %0, %3 : vector<1x32xi32>
    %c0_i32_0 = arith.constant 0 : i32
    %5 = vector.broadcast %c0_i32_0 : i32 to vector<1x32xi32>
    %6 = arith.cmpi ne, %4, %5 : vector<1x32xi32>
    %c0_i32_1 = arith.constant 0 : i32
    %7 = vector.broadcast %c0_i32_1 : i32 to vector<1x32xi32>
    %8 = arith.cmpi slt, %4, %7 : vector<1x32xi32>
    %c0_i32_2 = arith.constant 0 : i32
    %9 = arith.cmpi slt, %2, %c0_i32_2 : i32
    %10 = vector.broadcast %9 : i1 to vector<1x32xi1>
    %11 = vector.broadcast %10 : vector<1x32xi1> to vector<1x32xi1>
    %12 = arith.xori %8, %11 : vector<1x32xi1>
    %13 = arith.andi %12, %6 : vector<1x32xi1>
    %14 = vector.broadcast %2 : i32 to vector<1x32xi32>
    %15 = arith.addi %4, %14 : vector<1x32xi32>
    %16 = arith.select %13, %15, %4 : vector<1x32xi1>, vector<1x32xi32>
    %c0 = arith.constant 0 : index
    %c0_3 = arith.constant 0 : index
    %17 = vector.load %arg1[%c0, %c0_3] : memref<4x32xf32, #tpu.memory_space<vmem>>, vector<4x32xf32>
    %cst = arith.constant 0.000000e+00 : f32
    %18 = vector.broadcast %cst : f32 to vector<4x1xf32>
    %19 = vector.extract_strided_slice %17 {offsets = [0, 0], sizes = [4, 31], strides = [1, 1]} : vector<4x32xf32> to vector<4x31xf32>
    %20 = tpu.concatenate %18, %19 in 1 : vector<4x1xf32>, vector<4x31xf32> -> vector<4x32xf32>
    %c1_i32_4 = arith.constant 1 : i32
    %21 = vector.broadcast %c1_i32_4 : i32 to vector<1x32xi32>
    %22 = arith.cmpi sge, %16, %21 : vector<1x32xi32>
    %cst_5 = arith.constant 0.000000e+00 : f32
    %23 = vector.shape_cast %22 : vector<1x32xi1> to vector<1x32xi1>
    %24 = vector.broadcast %23 : vector<1x32xi1> to vector<4x32xi1>
    %25 = vector.broadcast %cst_5 : f32 to vector<4x32xf32>
    %26 = arith.select %24, %20, %25 : vector<4x32xi1>, vector<4x32xf32>
    %27 = vector.extract_strided_slice %17 {offsets = [0, 1], sizes = [4, 31], strides = [1, 1]} : vector<4x32xf32> to vector<4x31xf32>
    %cst_6 = arith.constant 0.000000e+00 : f32
    %28 = vector.broadcast %cst_6 : f32 to vector<4x1xf32>
    %29 = tpu.concatenate %27, %28 in 1 : vector<4x31xf32>, vector<4x1xf32> -> vector<4x32xf32>
    %c15_i32 = arith.constant 15 : i32
    %30 = vector.broadcast %c15_i32 : i32 to vector<1x32xi32>
    %31 = arith.cmpi slt, %16, %30 : vector<1x32xi32>
    %cst_7 = arith.constant 0.000000e+00 : f32
    %32 = vector.shape_cast %31 : vector<1x32xi1> to vector<1x32xi1>
    %33 = vector.broadcast %32 : vector<1x32xi1> to vector<4x32xi1>
    %34 = vector.broadcast %cst_7 : f32 to vector<4x32xf32>
    %35 = arith.select %33, %29, %34 : vector<4x32xi1>, vector<4x32xf32>
    %36 = tpu.concatenate %26, %17, %35 in 0 : vector<4x32xf32>, vector<4x32xf32>, vector<4x32xf32> -> vector<12x32xf32>
    %c0_8 = arith.constant 0 : index
    %c0_9 = arith.constant 0 : index
    %37 = vector.load %arg2[%c0_8, %c0_9] : memref<16x12xf32, #tpu.memory_space<vmem>>, vector<16x12xf32>
    %cst_10 = arith.constant dense<0.000000e+00> : vector<16x32xf32>
    %38 = tpu.matmul %37, %36, %cst_10 {dimension_numbers = #tpu.dot_dimension_numbers<[1], [0], [0], [1], [0, 0, 1, 1], [], []>} : vector<16x12xf32>, vector<12x32xf32>, vector<16x32xf32> -> vector<16x32xf32>
    %c0_11 = arith.constant 0 : index
    %c0_12 = arith.constant 0 : index
    %39 = vector.load %arg3[%c0_11, %c0_12] : memref<16x1xf32, #tpu.memory_space<vmem>>, vector<16x1xf32>
    %40 = vector.broadcast %39 : vector<16x1xf32> to vector<16x32xf32>
    %41 = arith.addf %38, %40 : vector<16x32xf32>
    %cst_13 = arith.constant 0.000000e+00 : f32
    %42 = vector.broadcast %cst_13 : f32 to vector<16x32xf32>
    %43 = arith.maximumf %41, %42 : vector<16x32xf32>
    %44 = vector.extract_strided_slice %43 {offsets = [0, 0], sizes = [8, 32], strides = [1, 1]} : vector<16x32xf32> to vector<8x32xf32>
    %45 = vector.extract_strided_slice %43 {offsets = [8, 0], sizes = [8, 32], strides = [1, 1]} : vector<16x32xf32> to vector<8x32xf32>
    %cst_14 = arith.constant 0.000000e+00 : f32
    %46 = vector.broadcast %cst_14 : f32 to vector<8x1xf32>
    %47 = vector.extract_strided_slice %44 {offsets = [0, 0], sizes = [8, 31], strides = [1, 1]} : vector<8x32xf32> to vector<8x31xf32>
    %48 = tpu.concatenate %46, %47 in 1 : vector<8x1xf32>, vector<8x31xf32> -> vector<8x32xf32>
    %c1_i32_15 = arith.constant 1 : i32
    %49 = vector.broadcast %c1_i32_15 : i32 to vector<1x32xi32>
    %50 = arith.cmpi sge, %16, %49 : vector<1x32xi32>
    %cst_16 = arith.constant 0.000000e+00 : f32
    %51 = vector.shape_cast %50 : vector<1x32xi1> to vector<1x32xi1>
    %52 = vector.broadcast %51 : vector<1x32xi1> to vector<8x32xi1>
    %53 = vector.broadcast %cst_16 : f32 to vector<8x32xf32>
    %54 = arith.select %52, %48, %53 : vector<8x32xi1>, vector<8x32xf32>
    %55 = vector.extract_strided_slice %44 {offsets = [0, 1], sizes = [8, 31], strides = [1, 1]} : vector<8x32xf32> to vector<8x31xf32>
    %cst_17 = arith.constant 0.000000e+00 : f32
    %56 = vector.broadcast %cst_17 : f32 to vector<8x1xf32>
    %57 = tpu.concatenate %55, %56 in 1 : vector<8x31xf32>, vector<8x1xf32> -> vector<8x32xf32>
    %c15_i32_18 = arith.constant 15 : i32
    %58 = vector.broadcast %c15_i32_18 : i32 to vector<1x32xi32>
    %59 = arith.cmpi slt, %16, %58 : vector<1x32xi32>
    %cst_19 = arith.constant 0.000000e+00 : f32
    %60 = vector.shape_cast %59 : vector<1x32xi1> to vector<1x32xi1>
    %61 = vector.broadcast %60 : vector<1x32xi1> to vector<8x32xi1>
    %62 = vector.broadcast %cst_19 : f32 to vector<8x32xf32>
    %63 = arith.select %61, %57, %62 : vector<8x32xi1>, vector<8x32xf32>
    %64 = tpu.concatenate %54, %44, %63 in 0 : vector<8x32xf32>, vector<8x32xf32>, vector<8x32xf32> -> vector<24x32xf32>
    %c0_20 = arith.constant 0 : index
    %c0_21 = arith.constant 0 : index
    %65 = vector.load %arg4[%c0_20, %c0_21] : memref<8x24xf32, #tpu.memory_space<vmem>>, vector<8x24xf32>
    %cst_22 = arith.constant dense<0.000000e+00> : vector<8x32xf32>
    %66 = tpu.matmul %65, %64, %cst_22 {dimension_numbers = #tpu.dot_dimension_numbers<[1], [0], [0], [1], [0, 0, 1, 1], [], []>} : vector<8x24xf32>, vector<24x32xf32>, vector<8x32xf32> -> vector<8x32xf32>
    %c0_23 = arith.constant 0 : index
    %c0_24 = arith.constant 0 : index
    %67 = vector.load %arg5[%c0_23, %c0_24] : memref<8x1xf32, #tpu.memory_space<vmem>>, vector<8x1xf32>
    %68 = vector.broadcast %67 : vector<8x1xf32> to vector<8x32xf32>
    %69 = arith.addf %66, %68 : vector<8x32xf32>
    %cst_25 = arith.constant 0.000000e+00 : f32
    %70 = vector.broadcast %cst_25 : f32 to vector<8x32xf32>
    %71 = arith.maximumf %69, %70 : vector<8x32xf32>
    %cst_26 = arith.constant 0.000000e+00 : f32
    %72 = vector.broadcast %cst_26 : f32 to vector<8x1xf32>
    %73 = vector.extract_strided_slice %71 {offsets = [0, 0], sizes = [8, 31], strides = [1, 1]} : vector<8x32xf32> to vector<8x31xf32>
    %74 = tpu.concatenate %72, %73 in 1 : vector<8x1xf32>, vector<8x31xf32> -> vector<8x32xf32>
    %c1_i32_27 = arith.constant 1 : i32
    %75 = vector.broadcast %c1_i32_27 : i32 to vector<1x32xi32>
    %76 = arith.cmpi sge, %16, %75 : vector<1x32xi32>
    %cst_28 = arith.constant 0.000000e+00 : f32
    %77 = vector.shape_cast %76 : vector<1x32xi1> to vector<1x32xi1>
    %78 = vector.broadcast %77 : vector<1x32xi1> to vector<8x32xi1>
    %79 = vector.broadcast %cst_28 : f32 to vector<8x32xf32>
    %80 = arith.select %78, %74, %79 : vector<8x32xi1>, vector<8x32xf32>
    %81 = vector.extract_strided_slice %71 {offsets = [0, 1], sizes = [8, 31], strides = [1, 1]} : vector<8x32xf32> to vector<8x31xf32>
    %cst_29 = arith.constant 0.000000e+00 : f32
    %82 = vector.broadcast %cst_29 : f32 to vector<8x1xf32>
    %83 = tpu.concatenate %81, %82 in 1 : vector<8x31xf32>, vector<8x1xf32> -> vector<8x32xf32>
    %c15_i32_30 = arith.constant 15 : i32
    %84 = vector.broadcast %c15_i32_30 : i32 to vector<1x32xi32>
    %85 = arith.cmpi slt, %16, %84 : vector<1x32xi32>
    %cst_31 = arith.constant 0.000000e+00 : f32
    %86 = vector.shape_cast %85 : vector<1x32xi1> to vector<1x32xi1>
    %87 = vector.broadcast %86 : vector<1x32xi1> to vector<8x32xi1>
    %88 = vector.broadcast %cst_31 : f32 to vector<8x32xf32>
    %89 = arith.select %87, %83, %88 : vector<8x32xi1>, vector<8x32xf32>
    %90 = tpu.concatenate %80, %71, %89 in 0 : vector<8x32xf32>, vector<8x32xf32>, vector<8x32xf32> -> vector<24x32xf32>
    %c0_32 = arith.constant 0 : index
    %c0_33 = arith.constant 0 : index
    %91 = vector.load %arg6[%c0_32, %c0_33] : memref<8x24xf32, #tpu.memory_space<vmem>>, vector<8x24xf32>
    %cst_34 = arith.constant dense<0.000000e+00> : vector<8x32xf32>
    %92 = tpu.matmul %91, %90, %cst_34 {dimension_numbers = #tpu.dot_dimension_numbers<[1], [0], [0], [1], [0, 0, 1, 1], [], []>} : vector<8x24xf32>, vector<24x32xf32>, vector<8x32xf32> -> vector<8x32xf32>
    %c0_35 = arith.constant 0 : index
    %c0_36 = arith.constant 0 : index
    %93 = vector.load %arg7[%c0_35, %c0_36] : memref<8x1xf32, #tpu.memory_space<vmem>>, vector<8x1xf32>
    %94 = vector.broadcast %93 : vector<8x1xf32> to vector<8x32xf32>
    %95 = arith.addf %92, %94 : vector<8x32xf32>
    %cst_37 = arith.constant 0.000000e+00 : f32
    %96 = vector.broadcast %cst_37 : f32 to vector<8x32xf32>
    %97 = arith.maximumf %95, %96 : vector<8x32xf32>
    %98 = arith.addf %97, %45 : vector<8x32xf32>
    %cst_38 = arith.constant 0.000000e+00 : f32
    %99 = vector.broadcast %cst_38 : f32 to vector<8x32xf32>
    %100 = arith.maximumf %98, %99 : vector<8x32xf32>
    %c0_39 = arith.constant 0 : index
    %c0_40 = arith.constant 0 : index
    %101 = vector.load %arg8[%c0_39, %c0_40] : memref<8x32xf32, #tpu.memory_space<vmem>>, vector<8x32xf32>
    tpu.vector_store %arg8[%c0_39, %c0_40], %100 {strides = array<i32>} : memref<8x32xf32, #tpu.memory_space<vmem>>, vector<8x32xf32>,
    return
  }
  func.func @transform_0(%arg0: i32) -> (i32, i32) {
    %c0_i32 = arith.constant 0 : i32
    %c0_i32_0 = arith.constant 0 : i32
    return %c0_i32, %arg0 : i32, i32
  }
  func.func @transform_1(%arg0: i32) -> (i32, i32) {
    %c0_i32 = arith.constant 0 : i32
    %c0_i32_0 = arith.constant 0 : i32
    %c0_i32_1 = arith.constant 0 : i32
    return %c0_i32, %c0_i32_0 : i32, i32
  }
  func.func @transform_2(%arg0: i32) -> (i32, i32) {
    %c0_i32 = arith.constant 0 : i32
    %c0_i32_0 = arith.constant 0 : i32
    %c0_i32_1 = arith.constant 0 : i32
    return %c0_i32, %c0_i32_0 : i32, i32
  }
  func.func @transform_3(%arg0: i32) -> (i32, i32) {
    %c0_i32 = arith.constant 0 : i32
    %c0_i32_0 = arith.constant 0 : i32
    %c0_i32_1 = arith.constant 0 : i32
    return %c0_i32, %c0_i32_0 : i32, i32
  }
  func.func @transform_4(%arg0: i32) -> (i32, i32) {
    %c0_i32 = arith.constant 0 : i32
    %c0_i32_0 = arith.constant 0 : i32
    %c0_i32_1 = arith.constant 0 : i32
    return %c0_i32, %c0_i32_0 : i32, i32
  }
  func.func @transform_5(%arg0: i32) -> (i32, i32) {
    %c0_i32 = arith.constant 0 : i32
    %c0_i32_0 = arith.constant 0 : i32
    %c0_i32_1 = arith.constant 0 : i32
    return %c0_i32, %c0_i32_0 : i32, i32
  }
  func.func @transform_6(%arg0: i32) -> (i32, i32) {
    %c0_i32 = arith.constant 0 : i32
    %c0_i32_0 = arith.constant 0 : i32
    %c0_i32_1 = arith.constant 0 : i32
    return %c0_i32, %c0_i32_0 : i32, i32
  }
  func.func @transform_7(%arg0: i32) -> (i32, i32) {
    %c0_i32 = arith.constant 0 : i32
    %c0_i32_0 = arith.constant 0 : i32
    return %c0_i32, %arg0 : i32, i32
  }
}

</mosaic_0001>

<llo_original>
// kernel: tpu_custom_call.1
$region0: #{tpu_custom_call.1}
  #allocation0 [shape = 'u32[]', space=smem, size = 0x4, offset = 0x4, fixed_abs, tag = 'smem constant byte address 0x4 - core index']
  #allocation1 [shape = 'u32[144,128]{1,0:T(1,128)}', space=vmem, size = 0x12000, scoped, tag = 'internal scratch']
  %s0 = inlined_call_operand.hbm [shape: f32[4,32], index: 0, kind: input, shape index: {}]
  %s1 = inlined_call_operand.vmem [shape: f32[16,12], index: 1, kind: input, shape index: {}]
  %s2 = inlined_call_operand.vmem [shape: f32[16,1], index: 2, kind: input, shape index: {}]
  %s3 = inlined_call_operand.vmem [shape: f32[8,24], index: 3, kind: input, shape index: {}]
  %s4 = inlined_call_operand.vmem [shape: f32[8,1], index: 4, kind: input, shape index: {}]
  %s5 = inlined_call_operand.vmem [shape: f32[8,24], index: 5, kind: input, shape index: {}]
  %s6 = inlined_call_operand.vmem [shape: f32[8,1], index: 6, kind: input, shape index: {}]
  %s7 = inlined_call_operand.hbm [shape: f32[8,32], index: 7, kind: output, shape index: {}]
  %s8 = sld [smem:[#allocation0]]
  $region42: #{tpu_custom_call.1} parent=0
    _
  %s10 = ssub.s32 1, %s8
  %s11 = scalar_select 0, %s10, %s8
  $region1: #{tpu_custom_call.1} parent=0
    #allocation2 [shape = 'u8[2048]{0}', space=vmem, size = 0x800, scoped, tag = 'input window, operand 0, single buffered']
    #allocation3 [shape = 's32[1]{0}', space=sflag, size = 0x4, scoped, tag = 'scoped memory for tpu_custom_call.1']
    #allocation4 [shape = 's32[1]{0}', space=sflag, size = 0x4, scoped, tag = 'scoped memory for tpu_custom_call.1']
    #allocation5 [shape = 'u8[4096]{0}', space=vmem, size = 0x1000, scoped, tag = 'output window, operand 0, single buffered']
    %12 = vsyncpa [#allocation3], 0
    %13 = vsyncpa [#allocation4], 0
    // Predicated region
    $region2: #{tpu_custom_call.1} parent=1 // pred_check
      _
    $region3: #{tpu_custom_call.1} parent=1 // pred_check_branch
      %15 = sbr.rel (0) target = $region5
    $region4: #{tpu_custom_call.1} parent=1 // pred_region
      %s17 = ssub.s32 64, 64
      %18 = vsyncadd [#allocation3], %s17
      %s20 = sshll.u32 [#allocation2], 4
      %s21 = int_to_ptr.vmem [resolvable:$true] %s20
      %23 = dma.hbm_to_vmem [thread:$0]  %s0, 64, %s21, [#allocation3]
    $region5: #{tpu_custom_call.1} parent=1 // pred_fallthru
      _
    // Predicated region
    $region6: #{tpu_custom_call.1} parent=1 // pred_check
      _
    $region7: #{tpu_custom_call.1} parent=1 // pred_check_branch
      %25 = sbr.rel (0) target = $region9
    $region8: #{tpu_custom_call.1} parent=1 // pred_region
      _
    $region9: #{tpu_custom_call.1} parent=1 // pred_fallthru
      _
    // Predicated region
    $region10: #{tpu_custom_call.1} parent=1 // pred_check
      _
    $region11: #{tpu_custom_call.1} parent=1 // pred_check_branch
      %27 = sbr.rel (0) target = $region13
    $region12: #{tpu_custom_call.1} parent=1 // pred_region
      _
    $region13: #{tpu_custom_call.1} parent=1 // pred_fallthru
      _
    // Predicated region
    $region14: #{tpu_custom_call.1} parent=1 // pred_check
      _
    $region15: #{tpu_custom_call.1} parent=1 // pred_check_branch
      %29 = sbr.rel (0) target = $region17
    $region16: #{tpu_custom_call.1} parent=1 // pred_region
      _
    $region17: #{tpu_custom_call.1} parent=1 // pred_fallthru
      _
    // Predicated region
    $region18: #{tpu_custom_call.1} parent=1 // pred_check
      _
    $region19: #{tpu_custom_call.1} parent=1 // pred_check_branch
      %31 = sbr.rel (0) target = $region21
    $region20: #{tpu_custom_call.1} parent=1 // pred_region
      _
    $region21: #{tpu_custom_call.1} parent=1 // pred_fallthru
      _
    // Predicated region
    $region22: #{tpu_custom_call.1} parent=1 // pred_check
      _
    $region23: #{tpu_custom_call.1} parent=1 // pred_check_branch
      %33 = sbr.rel (0) target = $region25
    $region24: #{tpu_custom_call.1} parent=1 // pred_region
      _
    $region25: #{tpu_custom_call.1} parent=1 // pred_fallthru
      _
    // Predicated region
    $region26: #{tpu_custom_call.1} parent=1 // pred_check
      _
    $region27: #{tpu_custom_call.1} parent=1 // pred_check_branch
      %35 = sbr.rel (0) target = $region29
    $region28: #{tpu_custom_call.1} parent=1 // pred_region
      _
    $region29: #{tpu_custom_call.1} parent=1 // pred_fallthru
      _
    // Predicated region
    $region30: #{tpu_custom_call.1} parent=1 // pred_check
      _
    $region31: #{tpu_custom_call.1} parent=1 // pred_check_branch
      %37 = sbr.rel (0) target = $region33
    $region32: #{tpu_custom_call.1} parent=1 // pred_region
      %38 = dma.done [#allocation3], 64
    $region33: #{tpu_custom_call.1} parent=1 // pred_fallthru
      _
    %v39 = vlaneseq
    %v40 = vand.u32 %v39, 127
    %vm41 = vcmp.lt.s32.totalorder %v40, 0
    %v42 = vsub.s32 0, %v40
    %v43 = vsel %vm41, %v42, %v40
    %v44 = vshrl.u32 %v43, 4
    %v45 = vand.u32 %v43, 15
    %v46 = vsub.s32 0, %v45
    %v47 = vsel %vm41, %v46, %v45
    %vm48 = vcmp.ne.s32.totalorder %v47, 0
    %vm49 = vcmp.lt.s32.totalorder %v47, 0
    %vm50 = vmand %vm49, %vm48
    %v51 = vadd.s32 %v47, 16
    %v52 = vsel %vm50, %v51, %v47
    %v53 = vld [vmem:[#allocation2] sm:$0xf]
    %55 = vrot.lane.b32.xlu0 %v53, 1
    %v56 = vpop.permute.xlu0 %55
    %vm58 = vcmask 7168
    %v59 = vsel %vm58, 0.0, %v56
    %vm60 = vcmp.ge.s32.totalorder %v52, 1
    %v61 = vsel %vm60, 1, 0
    %vm62 = vcmp.eq.s32.totalorder %v61, 1
    %v63 = vsel %vm62, %v59, 0.0
    %64 = vrot.lane.b32.xlu0 %v53, 127
    %v65 = vpop.permute.xlu0 %64
    %vm67 = vcmask 252928
    %v68 = vsel %vm67, %v65, 0.0
    %vm69 = vcmp.lt.s32.totalorder %v52, 15
    %v70 = vsel %vm69, 1, 0
    %vm71 = vcmp.eq.s32.totalorder %v70, 1
    %v72 = vsel %vm71, %v68, 0.0
    %v73 = vrot.slane %v53, 4
    %vm75 = vcmask 1043456
    %v76 = vsel %vm75, %v63, %v73
    %v77 = vld [vmem:[%s1] sm:$0xff]
    %v78 = vld [vmem:[%s1 + $0x8] sm:$0xff]
    %v79 = vld [vmem:[%s2] sm:$0xff]
    %v80 = vld [vmem:[%s2 + $0x8] sm:$0xff]
    %82 = vset.pattern.permute.xlu0 0
    %83 = vperm.xlu0 %82, %v79
    %v84 = vpop.permute.xlu0 %83
    %87 = vset.pattern.permute.xlu0 0
    %88 = vperm.xlu0 %87, %v80
    %v89 = vpop.permute.xlu0 %88
    %vm91 = vcmask 97280
    %v93 = vsel %vm91, %v77, 0
    %v96 = vsel %vm91, %v78, 0
    %v99 = vsel %vm75, %v72, 0
    %101 = vmatprep.subr.mxu0 0.0
    %102 = vmatpush1.msra.mxu0 0.0
    %103 = vmatprep.subr.mxu0 0.0
    %104 = vmatpush1.msra.mxu0 0.0
    %105 = vmatprep.subr.mxu0 0.0
    %106 = vmatpush1.msra.mxu0 0.0
    %107 = vmatprep.subr.mxu0 0.0
    %108 = vmatpush1.msra.mxu0 0.0
    %109 = vmatprep.subr.mxu0 0.0
    %110 = vmatpush1.msra.mxu0 0.0
    %111 = vmatprep.subr.mxu0 0.0
    %112 = vmatpush1.msra.mxu0 0.0
    %113 = vmatprep.subr.mxu0 0.0
    %114 = vmatpush1.msra.mxu0 0.0
    %115 = vmatprep.subr.mxu0 0.0
    %116 = vmatpush1.msra.mxu0 0.0
    %117 = vmatprep.subr.mxu0 0.0
    %118 = vmatpush1.msra.mxu0 0.0
    %119 = vmatprep.subr.mxu0 0.0
    %120 = vmatpush1.msra.mxu0 0.0
    %121 = vmatprep.subr.mxu0 0.0
    %122 = vmatpush1.msra.mxu0 0.0
    %123 = vmatprep.subr.mxu0 0.0
    %124 = vmatpush1.msra.mxu0 0.0
    %125 = vmatprep.subr.mxu0 0.0
    %126 = vmatpush1.msra.mxu0 0.0
    %127 = vmatprep.subr.mxu0 0.0
    %128 = vmatpush1.msra.mxu0 0.0
    %129 = vmatprep.subr.mxu0 0.0
    %130 = vmatpush1.msra.mxu0 %v99
    %131 = vmatprep.subr.mxu0 0.0
    %132 = vmatpush1.msra.mxu0 %v76
    %133 = vmatprep.subr.mxu0 0.0
    %134 = vmatpush2.msra.mxu0 0.0
    %135 = vmatprep.subr.mxu0 0.0
    %136 = vmatpush2.msra.mxu0 0.0
    %137 = vmatprep.subr.mxu0 0.0
    %138 = vmatpush2.msra.mxu0 0.0
    %139 = vmatprep.subr.mxu0 0.0
    %140 = vmatpush2.msra.mxu0 0.0
    %141 = vmatprep.subr.mxu0 0.0
    %142 = vmatpush2.msra.mxu0 0.0
    %143 = vmatprep.subr.mxu0 0.0
    %144 = vmatpush2.msra.mxu0 0.0
    %145 = vmatprep.subr.mxu0 0.0
    %146 = vmatpush2.msra.mxu0 0.0
    %147 = vmatprep.subr.mxu0 0.0
    %148 = vmatpush2.msra.mxu0 0.0
    %149 = vmatprep.subr.mxu0 0.0
    %150 = vmatpush2.msra.mxu0 0.0
    %151 = vmatprep.subr.mxu0 0.0
    %152 = vmatpush2.msra.mxu0 0.0
    %153 = vmatprep.subr.mxu0 0.0
    %154 = vmatpush2.msra.mxu0 0.0
    %155 = vmatprep.subr.mxu0 0.0
    %156 = vmatpush2.msra.mxu0 0.0
    %157 = vmatprep.subr.mxu0 0.0
    %158 = vmatpush2.msra.mxu0 0.0
    %159 = vmatprep.subr.mxu0 0.0
    %160 = vmatpush2.msra.mxu0 0.0
    %161 = vmatprep.subr.mxu0 0.0
    %162 = vmatpush2.msra.mxu0 0.0
    %163 = vmatprep.subr.mxu0 0.0
    %164 = vmatpush2.msra.mxu0 0.0
    %165 = vmatprep.mubr.f32.mxu0 0.0
    %166 = vmatmul.mubr.f32.gmra.mxu0 %v93
    %v167 = vpop.f32.mrf.mxu0
    %v168 = vadd.f32 %v84, %v167
    %v169 = vpop.f32.mrf.mxu0
    %170 = vmatprep.mubr.f32.mxu0 0.0
    %171 = vmatmul.mubr.f32.gmra.mxu0 %v96
    %v172 = vpop.f32.mrf.mxu0
    %v173 = vadd.f32 %v89, %v172
    %v174 = vpop.f32.mrf.mxu0
    %175 = vdwg.mxu0
    %v176 = vmax.f32 %v168, 0.0
    %v177 = vmax.f32 %v173, 0.0
    %179 = vrot.lane.b32.xlu0 %v176, 1
    %v180 = vpop.permute.xlu0 %179
    %v182 = vsel %vm58, 0.0, %v180
    %v183 = vsel %vm62, %v182, 0.0
    %184 = vrot.lane.b32.xlu0 %v176, 127
    %v185 = vpop.permute.xlu0 %184
    %v187 = vsel %vm67, %v185, 0.0
    %v188 = vsel %vm71, %v187, 0.0
    %v189 = vld [vmem:[%s3] sm:$0xff]
    %v190 = vld [vmem:[%s4] sm:$0xff]
    %192 = vset.pattern.permute.xlu0 0
    %193 = vperm.xlu0 %192, %v190
    %v194 = vpop.permute.xlu0 %193
    %vm196 = vcmask 195584
    %v198 = vsel %vm196, %v189, 0
    %200 = vmatprep.subr.mxu0 0.0
    %201 = vmatpush1.msra.mxu0 0.0
    %202 = vmatprep.subr.mxu0 0.0
    %203 = vmatpush1.msra.mxu0 0.0
    %204 = vmatprep.subr.mxu0 0.0
    %205 = vmatpush1.msra.mxu0 0.0
    %206 = vmatprep.subr.mxu0 0.0
    %207 = vmatpush1.msra.mxu0 0.0
    %208 = vmatprep.subr.mxu0 0.0
    %209 = vmatpush1.msra.mxu0 0.0
    %210 = vmatprep.subr.mxu0 0.0
    %211 = vmatpush1.msra.mxu0 0.0
    %212 = vmatprep.subr.mxu0 0.0
    %213 = vmatpush1.msra.mxu0 0.0
    %214 = vmatprep.subr.mxu0 0.0
    %215 = vmatpush1.msra.mxu0 0.0
    %216 = vmatprep.subr.mxu0 0.0
    %217 = vmatpush1.msra.mxu0 0.0
    %218 = vmatprep.subr.mxu0 0.0
    %219 = vmatpush1.msra.mxu0 0.0
    %220 = vmatprep.subr.mxu0 0.0
    %221 = vmatpush1.msra.mxu0 0.0
    %222 = vmatprep.subr.mxu0 0.0
    %223 = vmatpush1.msra.mxu0 0.0
    %224 = vmatprep.subr.mxu0 0.0
    %225 = vmatpush1.msra.mxu0 0.0
    %226 = vmatprep.subr.mxu0 0.0
    %227 = vmatpush1.msra.mxu0 %v188
    %228 = vmatprep.subr.mxu0 0.0
    %229 = vmatpush1.msra.mxu0 %v176
    %230 = vmatprep.subr.mxu0 0.0
    %231 = vmatpush1.msra.mxu0 %v183
    %232 = vmatprep.subr.mxu0 0.0
    %233 = vmatpush2.msra.mxu0 0.0
    %234 = vmatprep.subr.mxu0 0.0
    %235 = vmatpush2.msra.mxu0 0.0
    %236 = vmatprep.subr.mxu0 0.0
    %237 = vmatpush2.msra.mxu0 0.0
    %238 = vmatprep.subr.mxu0 0.0
    %239 = vmatpush2.msra.mxu0 0.0
    %240 = vmatprep.subr.mxu0 0.0
    %241 = vmatpush2.msra.mxu0 0.0
    %242 = vmatprep.subr.mxu0 0.0
    %243 = vmatpush2.msra.mxu0 0.0
    %244 = vmatprep.subr.mxu0 0.0
    %245 = vmatpush2.msra.mxu0 0.0
    %246 = vmatprep.subr.mxu0 0.0
    %247 = vmatpush2.msra.mxu0 0.0
    %248 = vmatprep.subr.mxu0 0.0
    %249 = vmatpush2.msra.mxu0 0.0
    %250 = vmatprep.subr.mxu0 0.0
    %251 = vmatpush2.msra.mxu0 0.0
    %252 = vmatprep.subr.mxu0 0.0
    %253 = vmatpush2.msra.mxu0 0.0
    %254 = vmatprep.subr.mxu0 0.0
    %255 = vmatpush2.msra.mxu0 0.0
    %256 = vmatprep.subr.mxu0 0.0
    %257 = vmatpush2.msra.mxu0 0.0
    %258 = vmatprep.subr.mxu0 0.0
    %259 = vmatpush2.msra.mxu0 0.0
    %260 = vmatprep.subr.mxu0 0.0
    %261 = vmatpush2.msra.mxu0 0.0
    %262 = vmatprep.subr.mxu0 0.0
    %263 = vmatpush2.msra.mxu0 0.0
    %264 = vmatprep.mubr.f32.mxu0 0.0
    %265 = vmatmul.mubr.f32.gmra.mxu0 %v198
    %v266 = vpop.f32.mrf.mxu0
    %v267 = vadd.f32 %v194, %v266
    %v268 = vpop.f32.mrf.mxu0
    %269 = vdwg.mxu0
    %v270 = vmax.f32 %v267, 0.0
    %272 = vrot.lane.b32.xlu0 %v270, 1
    %v273 = vpop.permute.xlu0 %272
    %v275 = vsel %vm58, 0.0, %v273
    %v276 = vsel %vm62, %v275, 0.0
    %277 = vrot.lane.b32.xlu0 %v270, 127
    %v278 = vpop.permute.xlu0 %277
    %v280 = vsel %vm67, %v278, 0.0
    %v281 = vsel %vm71, %v280, 0.0
    %v282 = vld [vmem:[%s5] sm:$0xff]
    %v283 = vld [vmem:[%s6] sm:$0xff]
    %285 = vset.pattern.permute.xlu0 0
    %286 = vperm.xlu0 %285, %v283
    %v287 = vpop.permute.xlu0 %286
    %v290 = vsel %vm196, %v282, 0
    %292 = vmatprep.subr.mxu0 0.0
    %293 = vmatpush1.msra.mxu0 0.0
    %294 = vmatprep.subr.mxu0 0.0
    %295 = vmatpush1.msra.mxu0 0.0
    %296 = vmatprep.subr.mxu0 0.0
    %297 = vmatpush1.msra.mxu0 0.0
    %298 = vmatprep.subr.mxu0 0.0
    %299 = vmatpush1.msra.mxu0 0.0
    %300 = vmatprep.subr.mxu0 0.0
    %301 = vmatpush1.msra.mxu0 0.0
    %302 = vmatprep.subr.mxu0 0.0
    %303 = vmatpush1.msra.mxu0 0.0
    %304 = vmatprep.subr.mxu0 0.0
    %305 = vmatpush1.msra.mxu0 0.0
    %306 = vmatprep.subr.mxu0 0.0
    %307 = vmatpush1.msra.mxu0 0.0
    %308 = vmatprep.subr.mxu0 0.0
    %309 = vmatpush1.msra.mxu0 0.0
    %310 = vmatprep.subr.mxu0 0.0
    %311 = vmatpush1.msra.mxu0 0.0
    %312 = vmatprep.subr.mxu0 0.0
    %313 = vmatpush1.msra.mxu0 0.0
    %314 = vmatprep.subr.mxu0 0.0
    %315 = vmatpush1.msra.mxu0 0.0
    %316 = vmatprep.subr.mxu0 0.0
    %317 = vmatpush1.msra.mxu0 0.0
    %318 = vmatprep.subr.mxu0 0.0
    %319 = vmatpush1.msra.mxu0 %v281
    %320 = vmatprep.subr.mxu0 0.0
    %321 = vmatpush1.msra.mxu0 %v270
    %322 = vmatprep.subr.mxu0 0.0
    %323 = vmatpush1.msra.mxu0 %v276
    %324 = vmatprep.subr.mxu0 0.0
    %325 = vmatpush2.msra.mxu0 0.0
    %326 = vmatprep.subr.mxu0 0.0
    %327 = vmatpush2.msra.mxu0 0.0
    %328 = vmatprep.subr.mxu0 0.0
    %329 = vmatpush2.msra.mxu0 0.0
    %330 = vmatprep.subr.mxu0 0.0
    %331 = vmatpush2.msra.mxu0 0.0
    %332 = vmatprep.subr.mxu0 0.0
    %333 = vmatpush2.msra.mxu0 0.0
    %334 = vmatprep.subr.mxu0 0.0
    %335 = vmatpush2.msra.mxu0 0.0
    %336 = vmatprep.subr.mxu0 0.0
    %337 = vmatpush2.msra.mxu0 0.0
    %338 = vmatprep.subr.mxu0 0.0
    %339 = vmatpush2.msra.mxu0 0.0
    %340 = vmatprep.subr.mxu0 0.0
    %341 = vmatpush2.msra.mxu0 0.0
    %342 = vmatprep.subr.mxu0 0.0
    %343 = vmatpush2.msra.mxu0 0.0
    %344 = vmatprep.subr.mxu0 0.0
    %345 = vmatpush2.msra.mxu0 0.0
    %346 = vmatprep.subr.mxu0 0.0
    %347 = vmatpush2.msra.mxu0 0.0
    %348 = vmatprep.subr.mxu0 0.0
    %349 = vmatpush2.msra.mxu0 0.0
    %350 = vmatprep.subr.mxu0 0.0
    %351 = vmatpush2.msra.mxu0 0.0
    %352 = vmatprep.subr.mxu0 0.0
    %353 = vmatpush2.msra.mxu0 0.0
    %354 = vmatprep.subr.mxu0 0.0
    %355 = vmatpush2.msra.mxu0 0.0
    %356 = vmatprep.mubr.f32.mxu0 0.0
    %357 = vmatmul.mubr.f32.gmra.mxu0 %v290
    %v358 = vpop.f32.mrf.mxu0
    %v359 = vadd.f32 %v287, %v358
    %v360 = vpop.f32.mrf.mxu0
    %361 = vdwg.mxu0
    %v362 = vmax.f32 %v359, 0.0
    %v363 = vadd.f32 %v362, %v177
    %v364 = vmax.f32 %v363, 0.0
    %vm365 = vcmask 261120
    %366 = vst.msk [vmem:[#allocation5] sm:$0xff] %vm365, %v364
    // Predicated region
    $region34: #{tpu_custom_call.1} parent=1 // pred_check
      _
    $region35: #{tpu_custom_call.1} parent=1 // pred_check_branch
      %368 = sbr.rel (0) target = $region37
    $region36: #{tpu_custom_call.1} parent=1 // pred_region
      %s370 = ssub.s32 128, 128
      %371 = vsyncadd [#allocation4], %s370
      %s373 = sshll.u32 [#allocation5], 4
      %s374 = int_to_ptr.vmem [resolvable:$true] %s373
      %376 = dma.vmem_to_hbm [thread:$0]  %s374, 128, %s7, [#allocation4]
    $region37: #{tpu_custom_call.1} parent=1 // pred_fallthru
      _
    // Predicated region
    $region38: #{tpu_custom_call.1} parent=1 // pred_check
      _
    $region39: #{tpu_custom_call.1} parent=1 // pred_check_branch
      %378 = sbr.rel (0) target = $region41
    $region40: #{tpu_custom_call.1} parent=1 // pred_region
      %379 = dma.done [#allocation4], 128
    $region41: #{tpu_custom_call.1} parent=1 // pred_fallthru
      _
    %380 = vsyncpa [#allocation3], 1
    %381 = vsyncpa [#allocation4], 1

</llo_original>
